<compile_context>
chip_gen: v5e
topology: v5e:2x2
jax: 0.10.0
libtpu: 0.0.40
codegen_flags: <defaults>
</compile_context>

<pallas_src>
import functools

import jax
import jax.numpy as jnp
from jax import lax
from jax.experimental import pallas as pl
from jax.experimental.pallas import tpu as pltpu

HID_SIZE = 128
DEFAULT_TILE_B = 1024   # batch rows per grid step (multiple of 128 when tiled)


def _round_up(x, m):
    return (x + m - 1) // m * m


def _choose_tiling(batch):
    """Returns (tile_b, b_pad, n_tiles) for the batch grid."""
    if batch < 256:                               # small batch: one dense tile
        tile_b = _round_up(max(batch, 1), 8)
        return tile_b, tile_b, 1
    n_tiles = max(2, pl.cdiv(batch, DEFAULT_TILE_B))
    n_tiles += n_tiles % 2                        # even count: balanced on v7x's 2 TCs
    tile_b = _round_up(pl.cdiv(batch, n_tiles), 128)  # lane dim of out block -> %128
    b_pad = n_tiles * tile_b
    # If splitting only existed to feed a second TensorCore but would mostly
    # write padded rows, prefer one dense tile (kernel is writeback-bound).
    if batch <= DEFAULT_TILE_B and (b_pad - batch) * 4 > batch:
        tile_b = _round_up(batch, 8)
        return tile_b, tile_b, 1
    return tile_b, b_pad, n_tiles


def a2c_fused_kernel(x_ref, wb_ref, bb_ref, wht_ref, bht_ref, o_ref, *, act_size):
    """One batch tile.

    x_ref  : (TILE_B, obs)        f32  (cast to bf16 in-kernel for the MXU)
    wb_ref : (obs, HID)           bf16    bb_ref : (1, HID)        f32
    wht_ref: (heads_pad, HID)     f32     bht_ref: (heads_pad, 1)  f32
    o_ref  : (heads_pad, TILE_B)  f32
             rows = [ tanh(mu) | softplus(var) | value | zero-pad ]
    """
    # base: Linear + ReLU (bf16 MXU operands, f32 accumulate / bias / ReLU)
    x_bf = x_ref[...].astype(jnp.bfloat16)
    h = jnp.dot(x_bf, wb_ref[...], preferred_element_type=jnp.float32)
    h = jnp.maximum(h + bb_ref[...], 0.0)

    # fused heads, emitted transposed: (heads_pad, HID) . (TILE_B, HID)^T
    # -> (heads_pad, TILE_B); batch stays the lane-dense axis of the store.
    y_t = lax.dot_general(wht_ref[...], h,
                          dimension_numbers=(((1,), (1,)), ((), ())),
                          preferred_element_type=jnp.float32)
    y_t = y_t + bht_ref[...]

    # per-row activation (rows are heads): tanh | softplus | identity.
    # The slab is only heads_pad x TILE_B, so evaluating both branches is cheap.
    row = lax.broadcasted_iota(jnp.int32, y_t.shape, 0)
    o_ref[...] = jnp.where(
        row < act_size, jnp.tanh(y_t),
        jnp.where(row < 2 * act_size, jnp.logaddexp(y_t, 0.0), y_t))


def model_a2c_forward(x, params):
    """x: (B, obs) f32.  params: (in,out) weights, (1,out) biases (f32)."""
    B, obs = x.shape
    act = params["wm"].shape[1]
    n_heads = 2 * act + 1
    heads_pad = _round_up(n_heads, 8)

    tile_b, b_pad, n_tiles = _choose_tiling(B)
    if b_pad != B:                    # pad the batch dim only when it is needed
        x = jnp.pad(x, ((0, b_pad - B), (0, 0)))

    # base weights in bf16 (MXU); fused heads stay f32 (precision is ~free here)
    wb = params["wb"].astype(jnp.bfloat16)          # (obs, HID)
    bb = params["bb"].astype(jnp.float32)           # (1, HID)

    # fused + transposed heads: rows = [mu(act) | var(act) | value(1) | pad]
    wht = jnp.zeros((heads_pad, HID_SIZE), jnp.float32)
    wht = wht.at[:act].set(params["wm"].T)
    wht = wht.at[act:2 * act].set(params["wv"].T)
    wht = wht.at[2 * act].set(params["wval"][:, 0])
    bht = jnp.zeros((heads_pad, 1), jnp.float32)
    bht = bht.at[:act, 0].set(params["bm"][0])
    bht = bht.at[act:2 * act, 0].set(params["bv"][0])
    bht = bht.at[2 * act, 0].set(params["bval"][0, 0])

    # explicit VMEM budget with headroom (v5e scoped default is only 16 MiB)
    vmem_needed = (2 * tile_b * obs * 4                  # x tile (double-buffered)
                   + obs * HID_SIZE * 2 + HID_SIZE * 4   # base weights/bias
                   + heads_pad * (HID_SIZE + 1) * 4      # fused head weights/bias
                   + 2 * heads_pad * tile_b * 4          # out tile (double-buffered)
                   + 3 * tile_b * HID_SIZE * 4)          # h + temporaries
    vmem_limit = int(min(64 * 1024 * 1024,
                         max(4 * vmem_needed, 16 * 1024 * 1024)))

    kernel = functools.partial(a2c_fused_kernel, act_size=act)
    out = pl.pallas_call(
        kernel,
        out_shape=jax.ShapeDtypeStruct((heads_pad, b_pad), jnp.float32),
        grid_spec=pltpu.PrefetchScalarGridSpec(
            num_scalar_prefetch=0,
            grid=(n_tiles,),
            in_specs=[
                pl.BlockSpec((tile_b, obs), lambda i: (i, 0)),          # x tile
                pl.BlockSpec((obs, HID_SIZE), lambda i: (0, 0)),        # Wb (resident)
                pl.BlockSpec((1, HID_SIZE), lambda i: (0, 0)),          # bb
                pl.BlockSpec((heads_pad, HID_SIZE), lambda i: (0, 0)),  # fused head W^T
                pl.BlockSpec((heads_pad, 1), lambda i: (0, 0)),         # fused head b^T
            ],
            out_specs=pl.BlockSpec((heads_pad, tile_b), lambda i: (0, i)),
        ),
        compiler_params=pltpu.CompilerParams(
            dimension_semantics=("parallel",),   # batch tiles shard across TCs (v7x)
            vmem_limit_bytes=vmem_limit),
    )(x, wb, bb, wht, bht)

    mu = out[:act, :B].T
    var = out[act:2 * act, :B].T
    val = out[2 * act:2 * act + 1, :B].T
    return mu, var, val


def init_params(key, obs_size, act_size):
    """PyTorch nn.Linear-style init (uniform +-1/sqrt(fan_in)).
    Weights stored pre-transposed as (in_features, out_features)."""
    def linear(k, fan_in, fan_out):
        k1, k2 = jax.random.split(k)
        bound = 1.0 / jnp.sqrt(fan_in)
        w = jax.random.uniform(k1, (fan_in, fan_out), jnp.float32, -bound, bound)
        b = jax.random.uniform(k2, (1, fan_out), jnp.float32, -bound, bound)
        return w, b

    k1, k2, k3, k4 = jax.random.split(key, 4)
    wb, bb = linear(k1, obs_size, HID_SIZE)
    wm, bm = linear(k2, HID_SIZE, act_size)
    wv, bv = linear(k3, HID_SIZE, act_size)
    wval, bval = linear(k4, HID_SIZE, 1)
    return {"wb": wb, "bb": bb, "wm": wm, "bm": bm,
            "wv": wv, "bv": bv, "wval": wval, "bval": bval}


def reference_forward_f32(x, p):
    h = jnp.maximum(x @ p["wb"] + p["bb"], 0.0)
    mu = jnp.tanh(h @ p["wm"] + p["bm"])
    var = jax.nn.softplus(h @ p["wv"] + p["bv"])
    val = h @ p["wval"] + p["bval"]
    return mu, var, val


def reference_forward_bf16(x, p):
    """Reference matching the kernel's bf16 base matmul / f32 head path."""
    bf = jnp.bfloat16
    h = jnp.maximum(
        jnp.dot(x.astype(bf), p["wb"].astype(bf),
                preferred_element_type=jnp.float32) + p["bb"], 0.0)
    mu = jnp.tanh(h @ p["wm"] + p["bm"])
    var = jnp.logaddexp(h @ p["wv"] + p["bv"], 0.0)
    val = h @ p["wval"] + p["bval"]
    return mu, var, val


if __name__ == "__main__":
    key = jax.random.PRNGKey(0)
    k_x, k_p = jax.random.split(key)

    B, OBS, ACT = 8, 16, 4
    x = jax.random.normal(k_x, (B, OBS), jnp.float32)
    params = init_params(k_p, OBS, ACT)

    mu, var, val = model_a2c_forward(x, params)
    jax.block_until_ready((mu, var, val))

    assert mu.shape == (B, ACT) and var.shape == (B, ACT) and val.shape == (B, 1)

    # check vs. a precision-matched (bf16 base matmul) reference
    mu_r, var_r, val_r = reference_forward_bf16(x, params)
    assert jnp.allclose(mu, mu_r, atol=2e-2, rtol=2e-2)
    assert jnp.allclose(var, var_r, atol=2e-2, rtol=2e-2)
    assert jnp.allclose(val, val_r, atol=2e-2, rtol=2e-2)

    # loose sanity check vs. the full-f32 PyTorch-equivalent reference
    mu_f, var_f, val_f = reference_forward_f32(x, params)
    assert jnp.allclose(mu, mu_f, atol=1e-1, rtol=1e-1)
    assert jnp.allclose(var, var_f, atol=1e-1, rtol=1e-1)
    assert jnp.allclose(val, val_f, atol=1e-1, rtol=1e-1)

    print("KERNEL_OK")
</pallas_src>

<mosaic_0001>
module attributes {stable_mosaic.version = 11 : i64} {
  func.func @a2c_fused_kernel(%arg0: i32, %arg1: memref<8x16xf32, #tpu.memory_space<vmem>>, %arg2: memref<16x128xbf16, #tpu.memory_space<vmem>>, %arg3: memref<1x128xf32, #tpu.memory_space<vmem>>, %arg4: memref<16x128xf32, #tpu.memory_space<vmem>>, %arg5: memref<16x1xf32, #tpu.memory_space<vmem>>, %arg6: memref<16x8xf32, #tpu.memory_space<vmem>>) attributes {dimension_semantics = [#tpu.dimension_semantics<parallel>], iteration_bounds = array<i64: 1>, scalar_prefetch = 0 : i64, scratch_operands = 0 : i64, tpu.core_type = #tpu.core_type<tc>, window_params = [{transform_indices = @transform_0, window_bounds = array<i64: 8, 16>}, {pipeline_mode = #tpu.pipeline_mode<synchronous>, transform_indices = @transform_1, window_bounds = array<i64: 16, 128>}, {pipeline_mode = #tpu.pipeline_mode<synchronous>, transform_indices = @transform_2, window_bounds = array<i64: 1, 128>}, {pipeline_mode = #tpu.pipeline_mode<synchronous>, transform_indices = @transform_3, window_bounds = array<i64: 16, 128>}, {pipeline_mode = #tpu.pipeline_mode<synchronous>, transform_indices = @transform_4, window_bounds = array<i64: 16, 1>}, {transform_indices = @transform_5, window_bounds = array<i64: 16, 8>}]} {
    %c0 = arith.constant 0 : index
    %c0_0 = arith.constant 0 : index
    %0 = vector.load %arg1[%c0, %c0_0] : memref<8x16xf32, #tpu.memory_space<vmem>>, vector<8x16xf32>
    %1 = arith.truncf %0 : vector<8x16xf32> to vector<8x16xbf16>
    %c0_1 = arith.constant 0 : index
    %c0_2 = arith.constant 0 : index
    %2 = vector.load %arg2[%c0_1, %c0_2] : memref<16x128xbf16, #tpu.memory_space<vmem>>, vector<16x128xbf16>
    %cst = arith.constant dense<0.000000e+00> : vector<8x128xf32>
    %3 = tpu.matmul %1, %2, %cst {dimension_numbers = #tpu.dot_dimension_numbers<[1], [0], [0], [1], [0, 0, 1, 1], [], []>} : vector<8x16xbf16>, vector<16x128xbf16>, vector<8x128xf32> -> vector<8x128xf32>
    %c0_3 = arith.constant 0 : index
    %c0_4 = arith.constant 0 : index
    %4 = vector.load %arg3[%c0_3, %c0_4] : memref<1x128xf32, #tpu.memory_space<vmem>>, vector<1x128xf32>
    %5 = vector.broadcast %4 : vector<1x128xf32> to vector<8x128xf32>
    %6 = arith.addf %3, %5 : vector<8x128xf32>
    %cst_5 = arith.constant 0.000000e+00 : f32
    %7 = vector.broadcast %cst_5 : f32 to vector<8x128xf32>
    %8 = arith.maximumf %6, %7 : vector<8x128xf32>
    %c0_6 = arith.constant 0 : index
    %c0_7 = arith.constant 0 : index
    %9 = vector.load %arg4[%c0_6, %c0_7] : memref<16x128xf32, #tpu.memory_space<vmem>>, vector<16x128xf32>
    %cst_8 = arith.constant dense<0.000000e+00> : vector<16x8xf32>
    %10 = tpu.matmul %9, %8, %cst_8 {dimension_numbers = #tpu.dot_dimension_numbers<[1], [1], [0], [0], [0, 0, 1, 0], [], []>} : vector<16x128xf32>, vector<8x128xf32>, vector<16x8xf32> -> vector<16x8xf32>
    %c0_9 = arith.constant 0 : index
    %c0_10 = arith.constant 0 : index
    %11 = vector.load %arg5[%c0_9, %c0_10] : memref<16x1xf32, #tpu.memory_space<vmem>>, vector<16x1xf32>
    %12 = vector.broadcast %11 : vector<16x1xf32> to vector<16x8xf32>
    %13 = arith.addf %10, %12 : vector<16x8xf32>
    %14 = tpu.iota {dimensions = array<i32: 0>} : vector<16x8xi32>
    %c4_i32 = arith.constant 4 : i32
    %15 = vector.broadcast %c4_i32 : i32 to vector<16x8xi32>
    %16 = arith.cmpi slt, %14, %15 : vector<16x8xi32>
    %17 = math.tanh %13 : vector<16x8xf32>
    %c8_i32 = arith.constant 8 : i32
    %18 = vector.broadcast %c8_i32 : i32 to vector<16x8xi32>
    %19 = arith.cmpi slt, %14, %18 : vector<16x8xi32>
    %cst_11 = arith.constant 0.000000e+00 : f32
    %20 = vector.broadcast %cst_11 : f32 to vector<16x8xf32>
    %21 = arith.maximumf %13, %20 : vector<16x8xf32>
    %22 = vector.broadcast %cst_11 : f32 to vector<16x8xf32>
    %23 = arith.subf %13, %22 : vector<16x8xf32>
    %24 = arith.cmpf one, %23, %23 : vector<16x8xf32>
    %25 = vector.broadcast %cst_11 : f32 to vector<16x8xf32>
    %26 = arith.addf %13, %25 : vector<16x8xf32>
    %27 = math.absf %23 : vector<16x8xf32>
    %cst_12 = arith.constant 0.000000e+00 : f32
    %28 = vector.broadcast %cst_12 : f32 to vector<16x8xf32>
    %29 = arith.subf %28, %27 : vector<16x8xf32>
    %30 = math.exp %29 : vector<16x8xf32>
    %31 = math.log1p %30 : vector<16x8xf32>
    %32 = arith.addf %21, %31 : vector<16x8xf32>
    %33 = arith.select %24, %26, %32 : vector<16x8xi1>, vector<16x8xf32>
    %34 = arith.select %19, %33, %13 : vector<16x8xi1>, vector<16x8xf32>
    %35 = arith.select %16, %17, %34 : vector<16x8xi1>, vector<16x8xf32>
    %c0_13 = arith.constant 0 : index
    %c0_14 = arith.constant 0 : index
    %36 = vector.load %arg6[%c0_13, %c0_14] : memref<16x8xf32, #tpu.memory_space<vmem>>, vector<16x8xf32>
    tpu.vector_store %arg6[%c0_13, %c0_14], %35 {strides = array<i32>} : memref<16x8xf32, #tpu.memory_space<vmem>>, vector<16x8xf32>,
    return
  }
  func.func @transform_0(%arg0: i32) -> (i32, i32) {
    %c0_i32 = arith.constant 0 : i32
    %c0_i32_0 = arith.constant 0 : i32
    return %arg0, %c0_i32 : i32, i32
  }
  func.func @transform_1(%arg0: i32) -> (i32, i32) {
    %c0_i32 = arith.constant 0 : i32
    %c0_i32_0 = arith.constant 0 : i32
    %c0_i32_1 = arith.constant 0 : i32
    return %c0_i32, %c0_i32_0 : i32, i32
  }
  func.func @transform_2(%arg0: i32) -> (i32, i32) {
    %c0_i32 = arith.constant 0 : i32
    %c0_i32_0 = arith.constant 0 : i32
    %c0_i32_1 = arith.constant 0 : i32
    return %c0_i32, %c0_i32_0 : i32, i32
  }
  func.func @transform_3(%arg0: i32) -> (i32, i32) {
    %c0_i32 = arith.constant 0 : i32
    %c0_i32_0 = arith.constant 0 : i32
    %c0_i32_1 = arith.constant 0 : i32
    return %c0_i32, %c0_i32_0 : i32, i32
  }
  func.func @transform_4(%arg0: i32) -> (i32, i32) {
    %c0_i32 = arith.constant 0 : i32
    %c0_i32_0 = arith.constant 0 : i32
    %c0_i32_1 = arith.constant 0 : i32
    return %c0_i32, %c0_i32_0 : i32, i32
  }
  func.func @transform_5(%arg0: i32) -> (i32, i32) {
    %c0_i32 = arith.constant 0 : i32
    %c0_i32_0 = arith.constant 0 : i32
    return %c0_i32, %arg0 : i32, i32
  }
}

</mosaic_0001>

<llo_original>
// kernel: tpu_custom_call.1
$region0: #{tpu_custom_call.1}
  #allocation0 [shape = 'u32[]', space=smem, size = 0x4, offset = 0x4, fixed_abs, tag = 'smem constant byte address 0x4 - core index']
  #allocation1 [shape = 'u32[72,128]{1,0:T(1,128)}', space=vmem, size = 0x9000, scoped, tag = 'internal scratch']
  %s0 = inlined_call_operand.hbm [shape: f32[8,16], index: 0, kind: input, shape index: {}]
  %s1 = inlined_call_operand.hbm [shape: bf16[16,128], index: 1, kind: input, shape index: {}]
  %s2 = inlined_call_operand.vmem [shape: f32[1,128], index: 2, kind: input, shape index: {}]
  %s3 = inlined_call_operand.vmem [shape: f32[16,128], index: 3, kind: input, shape index: {}]
  %s4 = inlined_call_operand.vmem [shape: f32[16,1], index: 4, kind: input, shape index: {}]
  %s5 = inlined_call_operand.vmem [shape: f32[16,8], index: 5, kind: output, shape index: {}]
  %s6 = sld [smem:[#allocation0]]
  $region38: #{tpu_custom_call.1} parent=0
    _
  %s8 = ssub.s32 1, %s6
  %s9 = scalar_select 0, %s8, %s6
  $region1: #{tpu_custom_call.1} parent=0
    #allocation2 [shape = 'u8[4096]{0}', space=vmem, size = 0x1000, scoped, tag = 'input window, operand 0, single buffered']
    #allocation3 [shape = 's32[1]{0}', space=sflag, size = 0x4, scoped, tag = 'scoped memory for tpu_custom_call.1']
    #allocation4 [shape = 'u8[4096]{0}', space=vmem, size = 0x1000, scoped, tag = 'input window, operand 1, single buffered']
    #allocation5 [shape = 's32[1]{0}', space=sflag, size = 0x4, scoped, tag = 'scoped memory for tpu_custom_call.1']
    %10 = vsyncpa [#allocation3], 0
    %11 = vsyncpa [#allocation5], 0
    // Predicated region
    $region2: #{tpu_custom_call.1} parent=1 // pred_check
      _
    $region3: #{tpu_custom_call.1} parent=1 // pred_check_branch
      %13 = sbr.rel (0) target = $region5
    $region4: #{tpu_custom_call.1} parent=1 // pred_region
      %15 = vsyncadd [#allocation3], 0
      %s17 = sshll.u32 %s0, 4
      %s18 = int_to_ptr.hbm [resolvable:$true] %s17
      %s19 = sshll.u32 [#allocation2], 4
      %s20 = int_to_ptr.vmem [resolvable:$true] %s19
      %22 = dma.hbm_to_vmem [thread:$0]  %s18, 128, %s20, [#allocation3]
    $region5: #{tpu_custom_call.1} parent=1 // pred_fallthru
      _
    // Predicated region
    $region6: #{tpu_custom_call.1} parent=1 // pred_check
      _
    $region7: #{tpu_custom_call.1} parent=1 // pred_check_branch
      %24 = sbr.rel (0) target = $region9
    $region8: #{tpu_custom_call.1} parent=1 // pred_region
      %26 = vsyncadd [#allocation5], 0
      %s27 = sshll.u32 %s1, 4
      %s28 = int_to_ptr.hbm [resolvable:$true] %s27
      %s29 = sshll.u32 [#allocation4], 4
      %s30 = int_to_ptr.vmem [resolvable:$true] %s29
      %35 = dma.hbm_to_vmem [thread:$0]  %s28, 128, %s30, [#allocation5], 64, 64, 4
    $region9: #{tpu_custom_call.1} parent=1 // pred_fallthru
      _
    // Predicated region
    $region10: #{tpu_custom_call.1} parent=1 // pred_check
      _
    $region11: #{tpu_custom_call.1} parent=1 // pred_check_branch
      %37 = sbr.rel (0) target = $region13
    $region12: #{tpu_custom_call.1} parent=1 // pred_region
      _
    $region13: #{tpu_custom_call.1} parent=1 // pred_fallthru
      _
    // Predicated region
    $region14: #{tpu_custom_call.1} parent=1 // pred_check
      _
    $region15: #{tpu_custom_call.1} parent=1 // pred_check_branch
      %39 = sbr.rel (0) target = $region17
    $region16: #{tpu_custom_call.1} parent=1 // pred_region
      _
    $region17: #{tpu_custom_call.1} parent=1 // pred_fallthru
      _
    // Predicated region
    $region18: #{tpu_custom_call.1} parent=1 // pred_check
      _
    $region19: #{tpu_custom_call.1} parent=1 // pred_check_branch
      %41 = sbr.rel (0) target = $region21
    $region20: #{tpu_custom_call.1} parent=1 // pred_region
      _
    $region21: #{tpu_custom_call.1} parent=1 // pred_fallthru
      _
    // Predicated region
    $region22: #{tpu_custom_call.1} parent=1 // pred_check
      _
    $region23: #{tpu_custom_call.1} parent=1 // pred_check_branch
      %43 = sbr.rel (0) target = $region25
    $region24: #{tpu_custom_call.1} parent=1 // pred_region
      %45 = dma.done [#allocation3], 128
    $region25: #{tpu_custom_call.1} parent=1 // pred_fallthru
      _
    // Predicated region
    $region26: #{tpu_custom_call.1} parent=1 // pred_check
      _
    $region27: #{tpu_custom_call.1} parent=1 // pred_check_branch
      %47 = sbr.rel (0) target = $region29
    $region28: #{tpu_custom_call.1} parent=1 // pred_region
      %49 = dma.done [#allocation5], 128
    $region29: #{tpu_custom_call.1} parent=1 // pred_fallthru
      _
    %v51 = vld [vmem:[#allocation2] sm:$0xff]
    %v52 = vpack.c.bf16 %v51, %v51
    %v53 = vld [vmem:[#allocation4] sm:$0xf]
    %v54 = vld [vmem:[#allocation4 + $0x4] sm:$0xf]
    %v55 = vld [vmem:[%s2] sm:$0x1]
    %v57 = vperm.slane %v55, 0
    %v61 = vunpack.c.l.b16 %v53
    %v62 = vunpack.c.l.b16 %v54
    %v63 = vpack.c.b16 %v62, %v61
    %vm65 = vcmask 130048
    %v67 = vsel %vm65, %v52, 0
    %69 = vmatpush.bf16.msra.mxu0 0
    %70 = vmatpush.bf16.msra.mxu0 0
    %71 = vmatpush.bf16.msra.mxu0 0
    %72 = vmatpush.bf16.msra.mxu0 0
    %73 = vmatpush.bf16.msra.mxu0 0
    %74 = vmatpush.bf16.msra.mxu0 0
    %75 = vmatpush.bf16.msra.mxu0 0
    %76 = vmatpush.bf16.msra.mxu0 %v63
    %77 = vmatmul.bf16.gmra.mxu0 %v67
    %v78 = vpop.f32.mrf.mxu0
    %v79 = vadd.f32 %v57, %v78
    %v80 = vpop.f32.mrf.mxu0
    %81 = vdwg.mxu0
    %v82 = vmax.f32 %v79, 0.0
    %v83 = vld [vmem:[%s3] sm:$0xff]
    %v84 = vld [vmem:[%s3 + $0x8] sm:$0xff]
    %v85 = vld [vmem:[%s4] sm:$0xff]
    %v86 = vld [vmem:[%s4 + $0x8] sm:$0xff]
    %88 = vset.pattern.permute.xlu0 0
    %89 = vperm.xlu0 %88, %v85
    %v90 = vpop.permute.xlu0 %89
    %93 = vset.pattern.permute.xlu0 0
    %94 = vperm.xlu0 %93, %v86
    %v95 = vpop.permute.xlu0 %94
    %97 = vmatpush.xpose.msra.mxu0 0.0
    %98 = vmatpush.xpose.msra.mxu0 0.0
    %99 = vmatpush.xpose.msra.mxu0 0.0
    %100 = vmatpush.xpose.msra.mxu0 0.0
    %101 = vmatpush.xpose.msra.mxu0 0.0
    %102 = vmatpush.xpose.msra.mxu0 0.0
    %103 = vmatpush.xpose.msra.mxu0 0.0
    %104 = vmatpush.xpose.msra.mxu0 0.0
    %105 = vmatpush.xpose.msra.mxu0 0.0
    %106 = vmatpush.xpose.msra.mxu0 0.0
    %107 = vmatpush.xpose.msra.mxu0 0.0
    %108 = vmatpush.xpose.msra.mxu0 0.0
    %109 = vmatpush.xpose.msra.mxu0 0.0
    %110 = vmatpush.xpose.msra.mxu0 0.0
    %111 = vmatpush.xpose.msra.mxu0 0.0
    %112 = vmatpush.xpose.msra.mxu0 %v82
    %113 = vmatmul.f32.gmra.mxu0 %v83
    %v114 = vpop.f32.mrf.mxu0
    %v115 = vadd.f32 %v90, %v114
    %116 = vmatmul.f32.gmra.mxu0 %v84
    %v117 = vpop.f32.mrf.mxu0
    %v118 = vadd.f32 %v95, %v117
    %119 = vdwg.mxu0
    %v120 = vlaneseq
    %v121 = vshrl.u32 %v120, 7
    %v122 = vadd.s32 %v121, 8
    %vm123 = vcmp.lt.s32.totalorder %v121, 4
    %vm124 = vcmp.lt.s32.totalorder %v122, 4
    %v125 = vtanh.pop %v115
    %v126 = vtanh.pop %v118
    %vm127 = vcmp.lt.s32.totalorder %v121, 8
    %vm128 = vcmp.lt.s32.totalorder %v122, 8
    %v129 = vmax.f32 %v115, 0.0
    %v130 = vmax.f32 %v118, 0.0
    %vm131 = vcmp.ne.f32.partialorder %v115, %v115
    %vm132 = vcmp.ne.f32.partialorder %v118, %v118
    %v133 = vadd.f32 %v115, 0.0
    %v134 = vadd.f32 %v118, 0.0
    %v135 = vand.u32 2147483647, %v115
    %v136 = vand.u32 2147483647, %v118
    %v137 = vsub.f32 0.0, %v135
    %v138 = vsub.f32 0.0, %v136
    %v139 = vmul.f32 %v137, 1.442695
    %v140 = vpow.pop %v139
    %v141 = vmul.f32 %v138, 1.442695
    %v142 = vpow.pop %v141
    %v143 = vadd.f32 %v140, 1.0
    %v144 = vlog2.pop %v143
    %v145 = vmul.f32 %v144, 0.6931472
    %v146 = vmul.f32 -0.5, %v140
    %v147 = vadd.f32 %v146, 1.0
    %v148 = vmul.f32 %v147, %v140
    %v149 = vand.u32 2147483647, %v140
    %vm150 = vcmp.lt.f32.partialorder %v149, 0.0004427343
    %v151 = vsel %vm150, %v148, %v145
    %v152 = vadd.f32 %v142, 1.0
    %v153 = vlog2.pop %v152
    %v154 = vmul.f32 %v153, 0.6931472
    %v155 = vmul.f32 -0.5, %v142
    %v156 = vadd.f32 %v155, 1.0
    %v157 = vmul.f32 %v156, %v142
    %v158 = vand.u32 2147483647, %v142
    %vm159 = vcmp.lt.f32.partialorder %v158, 0.0004427343
    %v160 = vsel %vm159, %v157, %v154
    %v161 = vadd.f32 %v129, %v151
    %v162 = vadd.f32 %v130, %v160
    %v163 = vsel %vm131, %v133, %v161
    %v164 = vsel %vm132, %v134, %v162
    %v165 = vsel %vm127, %v163, %v115
    %v166 = vsel %vm128, %v164, %v118
    %v167 = vsel %vm123, %v125, %v165
    %v168 = vsel %vm124, %v126, %v166
    %vm169 = vcmask 64512
    %170 = vst.msk [vmem:[%s5] sm:$0xff] %vm169, %v167
    %171 = vst.msk [vmem:[%s5 + $0x8] sm:$0xff] %vm169, %v168
    // Predicated region
    $region30: #{tpu_custom_call.1} parent=1 // pred_check
      _
    $region31: #{tpu_custom_call.1} parent=1 // pred_check_branch
      %173 = sbr.rel (0) target = $region33
    $region32: #{tpu_custom_call.1} parent=1 // pred_region
      _
    $region33: #{tpu_custom_call.1} parent=1 // pred_fallthru
      _
    // Predicated region
    $region34: #{tpu_custom_call.1} parent=1 // pred_check
      _
    $region35: #{tpu_custom_call.1} parent=1 // pred_check_branch
      %175 = sbr.rel (0) target = $region37
    $region36: #{tpu_custom_call.1} parent=1 // pred_region
      _
    $region37: #{tpu_custom_call.1} parent=1 // pred_fallthru
      _
    %176 = vsyncpa [#allocation3], 1
    %177 = vsyncpa [#allocation5], 1

</llo_original>
